<compile_context>
chip_gen: v5e
topology: v5e:2x2
jax: 0.10.0
libtpu: 0.0.40
codegen_flags: <defaults>
</compile_context>

<pallas_src>
import functools

import jax
import jax.numpy as jnp
from jax.experimental import pallas as pl
from jax.experimental.pallas import tpu as pltpu


# ---------------------------------------------------------------------------
# helpers
# ---------------------------------------------------------------------------
def _round_up(x, m):
    return (x + m - 1) // m * m


def _node_tiling(n, max_tile=512):
    """Pick a (tile, padded_n) pair: full padded size when small, 512 when big.

    512x512 f32 A tiles double-buffered are 2 MiB -> safely under the 64 MiB
    physical VMEM of v7x (and trivially under v5e/v6e's 128 MiB).
    """
    n8 = _round_up(n, 8)
    if n8 <= max_tile:
        return n8, n8
    return max_tile, _round_up(n, max_tile)


_VMEM_LIMIT = 32 * 1024 * 1024  # explicit, safe on v5e/v6e/v7x


# ---------------------------------------------------------------------------
# kernel 1: per-relation transform  HW[r] = H @ W[r]
# ---------------------------------------------------------------------------
def _transform_kernel(h_ref, w_ref, o_ref):
    o_ref[0, :, :] = jnp.dot(
        h_ref[...], w_ref[0], preferred_element_type=jnp.float32
    ).astype(o_ref.dtype)


def _relational_transform(h, w_p, tile_n):
    """h: (n_pad, f_in_pad), w_p: (R, f_in_pad, f_out_pad) -> (R, n_pad, f_out_pad)."""
    n_pad, f_in = h.shape
    num_rels, _, f_out = w_p.shape
    n_tiles = n_pad // tile_n
    return pl.pallas_call(
        _transform_kernel,
        out_shape=jax.ShapeDtypeStruct((num_rels, n_pad, f_out), jnp.float32),
        grid_spec=pltpu.PrefetchScalarGridSpec(
            num_scalar_prefetch=0,
            grid=(num_rels, n_tiles),
            in_specs=[
                pl.BlockSpec((tile_n, f_in), lambda r, n: (n, 0)),
                pl.BlockSpec((1, f_in, f_out), lambda r, n: (r, 0, 0)),
            ],
            out_specs=pl.BlockSpec((1, tile_n, f_out), lambda r, n: (r, n, 0)),
        ),
        compiler_params=pltpu.CompilerParams(
            dimension_semantics=("parallel", "parallel"),
            vmem_limit_bytes=_VMEM_LIMIT,
        ),
    )(h, w_p)


# ---------------------------------------------------------------------------
# kernel 2: aggregation  out[dst_tile] = act( sum_{r, src_tile} A @ HW )
# ---------------------------------------------------------------------------
def _agg_kernel(nnz_ref, a_ref, hw_ref, o_ref, *, activation, valid_out):
    i = pl.program_id(0)  # dst tile   (parallel)
    r = pl.program_id(1)  # relation   (reduction)
    k = pl.program_id(2)  # src tile   (reduction)

    @pl.when((r == 0) & (k == 0))
    def _():
        o_ref[...] = jnp.zeros_like(o_ref)

    # skip MXU work for all-zero adjacency tiles (scalar-prefetched occupancy)
    idx = (i * pl.num_programs(1) + r) * pl.num_programs(2) + k

    @pl.when(nnz_ref[idx] != 0)
    def _():
        o_ref[...] += jnp.dot(
            a_ref[0], hw_ref[0], preferred_element_type=jnp.float32
        )

    @pl.when((r == pl.num_programs(1) - 1) & (k == pl.num_programs(2) - 1))
    def _():
        acc = o_ref[...]
        if activation == "relu":
            acc = jnp.maximum(acc, 0.0)
        elif activation == "softmax":
            # softmax over the (padded) feature axis, restricted to valid lanes
            lane = jax.lax.broadcasted_iota(jnp.int32, acc.shape, 1)
            mask = lane < valid_out
            masked = jnp.where(mask, acc, jnp.full_like(acc, -jnp.inf))
            m = jnp.max(masked, axis=1, keepdims=True)
            e = jnp.where(mask, jnp.exp(masked - m), 0.0)
            denom = jnp.sum(e, axis=1, keepdims=True)
            acc = e * pl.reciprocal(denom)  # approx=True ok if tol relaxed
        o_ref[...] = acc.astype(o_ref.dtype)


def _aggregate(adj_p, hw, nnz_flat, tile_n, activation, valid_out=None):
    """adj_p: (R, n_pad, n_pad), hw: (R, n_pad, f_out_pad) -> (n_pad, f_out_pad)."""
    num_rels, n_pad, _ = adj_p.shape
    f_out = hw.shape[2]
    n_tiles = n_pad // tile_n
    kernel = functools.partial(
        _agg_kernel, activation=activation, valid_out=valid_out
    )
    return pl.pallas_call(
        kernel,
        out_shape=jax.ShapeDtypeStruct((n_pad, f_out), jnp.float32),
        grid_spec=pltpu.PrefetchScalarGridSpec(
            num_scalar_prefetch=1,
            grid=(n_tiles, num_rels, n_tiles),
            in_specs=[
                pl.BlockSpec((1, tile_n, tile_n), lambda i, r, k, nnz: (r, i, k)),
                pl.BlockSpec((1, tile_n, f_out), lambda i, r, k, nnz: (r, k, 0)),
            ],
            out_specs=pl.BlockSpec((tile_n, f_out), lambda i, r, k, nnz: (i, 0)),
        ),
        compiler_params=pltpu.CompilerParams(
            dimension_semantics=("parallel", "arbitrary", "arbitrary"),
            vmem_limit_bytes=_VMEM_LIMIT,
        ),
    )(nnz_flat, adj_p, hw)


# ---------------------------------------------------------------------------
# full forward
# ---------------------------------------------------------------------------
def _pad_weight(w, f_in_pad, f_out_pad):
    num_rels, fi, fo = w.shape
    return jnp.zeros((num_rels, f_in_pad, f_out_pad), jnp.float32).at[
        :, :fi, :fo
    ].set(w)


def rgcn_forward(adj, weights, out_dim):
    """adj: (R, N, N) f32 dense per-relation norm-sum adjacency.
    weights: [W1 (R, N, h), W_hidden (R, h, h)*, W_out (R, h, out)]."""
    num_rels, num_nodes, _ = adj.shape
    tile_n, n_pad = _node_tiling(num_nodes)
    n_tiles = n_pad // tile_n

    adj_p = jnp.zeros((num_rels, n_pad, n_pad), jnp.float32).at[
        :, :num_nodes, :num_nodes
    ].set(adj)

    # per-(dst_tile, r, src_tile) occupancy flags (plain-JAX glue)
    occ = (
        adj_p.reshape(num_rels, n_tiles, tile_n, n_tiles, tile_n) != 0
    ).any(axis=(2, 4))
    nnz_flat = jnp.transpose(occ, (1, 0, 2)).astype(jnp.int32).reshape(-1)

    # --- input layer: H = one-hot(node id)  =>  H @ W1 == W1 (no identity) ---
    w0 = weights[0]
    f_pad = _round_up(w0.shape[2], 128)
    hw0 = jnp.zeros((num_rels, n_pad, f_pad), jnp.float32).at[
        :, :num_nodes, : w0.shape[2]
    ].set(w0)
    h = _aggregate(adj_p, hw0, nnz_flat, tile_n, activation="relu")

    # --- hidden layers (relu) ---
    for w in weights[1:-1]:
        f_out_pad = _round_up(w.shape[2], 128)
        w_p = _pad_weight(w, h.shape[1], f_out_pad)
        hw = _relational_transform(h, w_p, tile_n)
        h = _aggregate(adj_p, hw, nnz_flat, tile_n, activation="relu")

    # --- output layer (softmax over features, torch dim=1) ---
    w_last = weights[-1]
    f_out_pad = _round_up(w_last.shape[2], 128)
    w_p = _pad_weight(w_last, h.shape[1], f_out_pad)
    hw = _relational_transform(h, w_p, tile_n)
    h = _aggregate(
        adj_p, hw, nnz_flat, tile_n, activation="softmax",
        valid_out=w_last.shape[2],
    )
    return h[:num_nodes, :out_dim]


# ---------------------------------------------------------------------------
# demo + reference check
# ---------------------------------------------------------------------------
if __name__ == "__main__":
    num_nodes, h_dim, out_dim, num_rels, num_hidden_layers = 16, 32, 8, 4, 1
    num_edges = 48

    key = jax.random.PRNGKey(0)
    ks = jax.random.split(key, 4 + 2 + num_hidden_layers)

    # synthetic graph (deterministic): edges with relation type and norm
    src = jax.random.randint(ks[0], (num_edges,), 0, num_nodes)
    dst = jax.random.randint(ks[1], (num_edges,), 0, num_nodes)
    rel = jax.random.randint(ks[2], (num_edges,), 0, num_rels)
    norm = jax.random.uniform(ks[3], (num_edges,), jnp.float32, 0.1, 1.0)

    # dense per-relation adjacency: A[r, dst, src] = sum of norms (glue)
    adj = jnp.zeros((num_rels, num_nodes, num_nodes), jnp.float32)
    adj = adj.at[rel, dst, src].add(norm)

    # Xavier-uniform init with relu gain (sqrt(2)), per-relation weight slab
    def xavier(k, shape, gain):
        fan_in, fan_out = shape[1], shape[2]
        lim = gain * (6.0 / (fan_in + fan_out)) ** 0.5
        return jax.random.uniform(k, shape, jnp.float32, -lim, lim)

    gain = 2.0 ** 0.5
    weights = [xavier(ks[4], (num_rels, num_nodes, h_dim), gain)]
    for i in range(num_hidden_layers):
        weights.append(xavier(ks[5 + i], (num_rels, h_dim, h_dim), gain))
    weights.append(
        xavier(ks[5 + num_hidden_layers], (num_rels, h_dim, out_dim), gain)
    )

    out = jax.block_until_ready(rgcn_forward(adj, weights, out_dim))

    # pure-JAX reference check
    def ref_layer(a, h, w, act):
        msg = jnp.einsum("rds,sf,rfo->do", a, h, w)
        if act == "relu":
            return jnp.maximum(msg, 0.0)
        e = jnp.exp(msg - jnp.max(msg, axis=1, keepdims=True))
        return e / jnp.sum(e, axis=1, keepdims=True)

    h_ref = jnp.eye(num_nodes, dtype=jnp.float32)
    h_ref = ref_layer(adj, h_ref, weights[0], "relu")
    for w in weights[1:-1]:
        h_ref = ref_layer(adj, h_ref, w, "relu")
    h_ref = ref_layer(adj, h_ref, weights[-1], "softmax")

    assert out.shape == (num_nodes, out_dim)
    assert jnp.allclose(out, h_ref, atol=1e-5, rtol=1e-5), (
        float(jnp.max(jnp.abs(out - h_ref)))
    )
    print("KERNEL_OK")
</pallas_src>

<mosaic_0001>
module attributes {stable_mosaic.version = 11 : i64} {
  func.func @_agg_kernel(%arg0: i32, %arg1: i32, %arg2: i32, %arg3: memref<4xi32, #tpu.memory_space<smem>>, %arg4: memref<1x16x16xf32, #tpu.memory_space<vmem>>, %arg5: memref<1x16x128xf32, #tpu.memory_space<vmem>>, %arg6: memref<16x128xf32, #tpu.memory_space<vmem>>) attributes {dimension_semantics = [#tpu.dimension_semantics<parallel>, #tpu.dimension_semantics<arbitrary>, #tpu.dimension_semantics<arbitrary>], iteration_bounds = array<i64: 1, 4, 1>, scalar_prefetch = 1 : i64, scratch_operands = 0 : i64, tpu.core_type = #tpu.core_type<tc>, window_params = [{transform_indices = @transform_0, window_bounds = array<i64: 1, 16, 16>}, {transform_indices = @transform_1, window_bounds = array<i64: 1, 16, 128>}, {transform_indices = @transform_2, window_bounds = array<i64: 16, 128>}]} {
    %c0_i32 = arith.constant 0 : i32
    %0 = arith.cmpi eq, %arg1, %c0_i32 : i32
    %c0_i32_0 = arith.constant 0 : i32
    %1 = arith.cmpi eq, %arg2, %c0_i32_0 : i32
    %2 = arith.andi %0, %1 : i1
    %3 = arith.extui %2 : i1 to i32
    %c0_i32_1 = arith.constant 0 : i32
    %4 = arith.cmpi ne, %3, %c0_i32_1 : i32
    scf.if %4 {
      %cst = arith.constant 0.000000e+00 : f32
      %19 = vector.broadcast %cst : f32 to vector<16x128xf32>
      %c0 = arith.constant 0 : index
      %c0_6 = arith.constant 0 : index
      %20 = vector.load %arg6[%c0, %c0_6] : memref<16x128xf32, #tpu.memory_space<vmem>>, vector<16x128xf32>
      tpu.vector_store %arg6[%c0, %c0_6], %19 {strides = array<i32>} : memref<16x128xf32, #tpu.memory_space<vmem>>, vector<16x128xf32>,
    } else {
    }
    %c4_i32 = arith.constant 4 : i32
    %5 = arith.muli %arg0, %c4_i32 : i32
    %6 = arith.addi %5, %arg1 : i32
    %c1_i32 = arith.constant 1 : i32
    %7 = arith.muli %6, %c1_i32 : i32
    %8 = arith.addi %7, %arg2 : i32
    %9 = arith.index_cast %8 : i32 to index
    %10 = memref.load %arg3[%9] : memref<4xi32, #tpu.memory_space<smem>>
    %c0_i32_2 = arith.constant 0 : i32
    %11 = arith.cmpi ne, %10, %c0_i32_2 : i32
    %12 = arith.extui %11 : i1 to i32
    %c0_i32_3 = arith.constant 0 : i32
    %13 = arith.cmpi ne, %12, %c0_i32_3 : i32
    scf.if %13 {
      %c0 = arith.constant 0 : index
      %c0_6 = arith.constant 0 : index
      %19 = vector.load %arg6[%c0, %c0_6] : memref<16x128xf32, #tpu.memory_space<vmem>>, vector<16x128xf32>
      %c0_7 = arith.constant 0 : index
      %c0_8 = arith.constant 0 : index
      %c0_9 = arith.constant 0 : index
      %20 = vector.load %arg4[%c0_7, %c0_8, %c0_9] : memref<1x16x16xf32, #tpu.memory_space<vmem>>, vector<1x16x16xf32>
      %21 = vector.shape_cast %20 : vector<1x16x16xf32> to vector<16x16xf32>
      %c0_10 = arith.constant 0 : index
      %c0_11 = arith.constant 0 : index
      %c0_12 = arith.constant 0 : index
      %22 = vector.load %arg5[%c0_10, %c0_11, %c0_12] : memref<1x16x128xf32, #tpu.memory_space<vmem>>, vector<1x16x128xf32>
      %23 = vector.shape_cast %22 : vector<1x16x128xf32> to vector<16x128xf32>
      %cst = arith.constant dense<0.000000e+00> : vector<16x128xf32>
      %24 = tpu.matmul %21, %23, %cst {dimension_numbers = #tpu.dot_dimension_numbers<[1], [0], [0], [1], [0, 0, 1, 1], [], []>} : vector<16x16xf32>, vector<16x128xf32>, vector<16x128xf32> -> vector<16x128xf32>
      %25 = arith.addf %19, %24 : vector<16x128xf32>
      %c0_13 = arith.constant 0 : index
      %c0_14 = arith.constant 0 : index
      %26 = vector.load %arg6[%c0_13, %c0_14] : memref<16x128xf32, #tpu.memory_space<vmem>>, vector<16x128xf32>
      tpu.vector_store %arg6[%c0_13, %c0_14], %25 {strides = array<i32>} : memref<16x128xf32, #tpu.memory_space<vmem>>, vector<16x128xf32>,
    } else {
    }
    %c3_i32 = arith.constant 3 : i32
    %14 = arith.cmpi eq, %arg1, %c3_i32 : i32
    %c0_i32_4 = arith.constant 0 : i32
    %15 = arith.cmpi eq, %arg2, %c0_i32_4 : i32
    %16 = arith.andi %14, %15 : i1
    %17 = arith.extui %16 : i1 to i32
    %c0_i32_5 = arith.constant 0 : i32
    %18 = arith.cmpi ne, %17, %c0_i32_5 : i32
    scf.if %18 {
      %c0 = arith.constant 0 : index
      %c0_6 = arith.constant 0 : index
      %19 = vector.load %arg6[%c0, %c0_6] : memref<16x128xf32, #tpu.memory_space<vmem>>, vector<16x128xf32>
      %cst = arith.constant 0.000000e+00 : f32
      %20 = vector.broadcast %cst : f32 to vector<16x128xf32>
      %21 = arith.maximumf %19, %20 : vector<16x128xf32>
      %c0_7 = arith.constant 0 : index
      %c0_8 = arith.constant 0 : index
      %22 = vector.load %arg6[%c0_7, %c0_8] : memref<16x128xf32, #tpu.memory_space<vmem>>, vector<16x128xf32>
      tpu.vector_store %arg6[%c0_7, %c0_8], %21 {strides = array<i32>} : memref<16x128xf32, #tpu.memory_space<vmem>>, vector<16x128xf32>,
    } else {
    }
    return
  }
  func.func @transform_0(%arg0: i32, %arg1: i32, %arg2: i32, %arg3: memref<4xi32, #tpu.memory_space<smem>>) -> (i32, i32, i32) {
    %c0_i32 = arith.constant 0 : i32
    return %arg1, %arg0, %arg2 : i32, i32, i32
  }
  func.func @transform_1(%arg0: i32, %arg1: i32, %arg2: i32, %arg3: memref<4xi32, #tpu.memory_space<smem>>) -> (i32, i32, i32) {
    %c0_i32 = arith.constant 0 : i32
    %c0_i32_0 = arith.constant 0 : i32
    return %arg1, %arg2, %c0_i32 : i32, i32, i32
  }
  func.func @transform_2(%arg0: i32, %arg1: i32, %arg2: i32, %arg3: memref<4xi32, #tpu.memory_space<smem>>) -> (i32, i32) {
    %c0_i32 = arith.constant 0 : i32
    %c0_i32_0 = arith.constant 0 : i32
    return %arg0, %c0_i32 : i32, i32
  }
}

</mosaic_0001>

<llo_original>
// kernel: tpu_custom_call.1
$region0: #{tpu_custom_call.1}
  #allocation0 [shape = 'u32[]', space=smem, size = 0x4, offset = 0x4, fixed_abs, tag = 'smem constant byte address 0x4 - core index']
  #allocation1 [shape = 'u32[72,128]{1,0:T(1,128)}', space=vmem, size = 0x9000, scoped, tag = 'internal scratch']
  #allocation2 [shape = 's32[1]{0}', space=sflag, size = 0x4, scoped, tag = 'scoped memory for tpu_custom_call.1']
  #allocation3 [shape = 'u8[512]{0}', space=smem, size = 0x200, scoped, tag = 'prefetched SMEM operand 0']
  %s0 = inlined_call_operand.hbm [shape: s32[4], index: 0, kind: input, shape index: {}]
  %s1 = inlined_call_operand.hbm [shape: f32[4,16,16], index: 1, kind: input, shape index: {}]
  %s2 = inlined_call_operand.hbm [shape: f32[4,16,128], index: 2, kind: input, shape index: {}]
  %s3 = inlined_call_operand.hbm [shape: f32[16,128], index: 3, kind: output, shape index: {}]
  %s4 = sld [smem:[#allocation0]]
  $region61: #{tpu_custom_call.1} parent=0
    _
  %s6 = ssub.s32 1, %s4
  %s7 = scalar_select 0, %s6, %s4
  %s9 = sshll.u32 %s0, 4
  %s10 = int_to_ptr.hbm [resolvable:$true] %s9
  %12 = dma.hbm_to_smem %s10, 16, [#allocation3], [#allocation2]
  %14 = dma.done [#allocation2], 16
  %15 = sfence
  $region1: #{tpu_custom_call.1} parent=0
    #allocation4 [shape = 'u8[16384]{0}', space=vmem, size = 0x4000, scoped, tag = 'input window, operand 1']
    #allocation5 [shape = 's32[2]{0}', space=sflag, size = 0x8, scoped, tag = 'scoped memory for tpu_custom_call.1']
    #allocation6 [shape = 's32[2]{0}', space=sflag, size = 0x8, scoped, tag = 'scoped memory for tpu_custom_call.1']
    #allocation7 [shape = 'u8[16384]{0}', space=vmem, size = 0x4000, scoped, tag = 'input window, operand 2']
    #allocation8 [shape = 's32[2]{0}', space=sflag, size = 0x8, scoped, tag = 'scoped memory for tpu_custom_call.1']
    #allocation9 [shape = 'u8[8192]{0}', space=vmem, size = 0x2000, scoped, tag = 'output window, operand 0, single buffered']
    %16 = vsyncpa [#allocation5], 0
    %s17 = scalar_lea.sflag [#allocation5], 1
    %18 = vsyncpa %s17, 0
    %19 = vsyncpa [#allocation8], 0
    %s20 = scalar_lea.sflag [#allocation8], 1
    %21 = vsyncpa %s20, 0
    %22 = vsyncpa [#allocation6], 0
    loop: start=0, step=1, limit=6
    $region2: #{tpu_custom_call.1} parent=1 // loop_pre_header
      _
    $region3: #{tpu_custom_call.1} parent=1 // loop_header
      %s24 = sphi 0, %s28
      %p25 = scmp.ge.s32.totalorder %s24, 6
      %s31 = sphi 0, %s50
      %s32 = sphi 0, %s46
      %s33 = sphi 0, %s42
      %s34 = sphi 0, %s31
      %s35 = sphi 0, %s32
      %s36 = sphi 0, %s33
      %s37 = sphi 0, %s34
      %s38 = sphi 0, %s35
      %s39 = sphi 0, %s36
      %s57 = sphi 0, %s59
      %s60 = sphi 0, %s57
      %s61 = sphi 0, %s60
      %s77 = sphi 0, %s61
      %s85 = sphi 0, %s87
      %s88 = sphi 0, %s85
      %s89 = sphi 0, %s88
      %s105 = sphi 0, %s89
      %s111 = sphi 0, %s113
      %s114 = sphi 0, %s111
      %s115 = sphi 0, %s114
      %s131 = sphi 0, %s115
    $region4: #{tpu_custom_call.1} parent=1 // loop_header_branch
      %27 = sbr.rel (%p25) target = $region8
    $region5: #{tpu_custom_call.1} parent=1 // loop_body
      %s29 = ssub.s32 %s24, 1
      %s30 = ssub.s32 %s24, 2
      %s40 = sadd.s32 1, %s33
      %p41 = scmp.ge.s32.totalorder %s40, 1
      %s42 = scalar_select %p41, 0, %s40
      %s43 = sadd.s32 1, %s32
      %s44 = scalar_select %p41, %s43, %s32
      %p45 = scmp.ge.s32.totalorder %s44, 4
      %s46 = scalar_select %p45, 0, %s44
      %s47 = sadd.s32 1, %s31
      %s48 = scalar_select %p45, %s47, %s31
      %p49 = scmp.ge.s32.totalorder %s48, 1
      %s50 = scalar_select %p49, 0, %s48
      %s51 = ssub.s32 %s32, %s46
      %s52 = ssub.s32 %s31, %s50
      %s53 = sor.u32 %s51, %s52
      %s54 = ssub.s32 %s33, %s42
      %s55 = sor.u32 %s53, %s54
      %p56 = scmp.eq.s32.totalorder %s55, 0
      %s58 = sadd.s32 %s57, 1
      %s59 = scalar_select %p56, %s57, %s58
      %p62 = pneg %p56
      %p63 = scmp.eq.s32.totalorder %s24, 3
      %p64 = por %p62, %p63
      %p65 = scmp.ne.s32.totalorder %s57, %s60
      %p66 = scmp.eq.s32.totalorder %s24, 0
      %p67 = por %p65, %p66
      %p68 = scmp.ne.s32.totalorder %s57, %s60
      %p69 = scmp.eq.s32.totalorder %s29, 3
      %p70 = por %p68, %p69
      %p71 = scmp.ne.s32.totalorder %s60, %s61
      %p72 = scmp.eq.s32.totalorder %s29, 0
      %p73 = por %p71, %p72
      %p74 = scmp.ne.s32.totalorder %s60, %s61
      %p75 = scmp.eq.s32.totalorder %s30, 3
      %p76 = por %p74, %p75
      %p78 = scmp.ne.s32.totalorder %s61, %s77
      %p79 = scmp.eq.s32.totalorder %s30, 0
      %p80 = por %p78, %p79
      %s81 = ssub.s32 %s32, %s46
      %s82 = ssub.s32 %s33, %s42
      %s83 = sor.u32 %s81, %s82
      %p84 = scmp.eq.s32.totalorder %s83, 0
      %s86 = sadd.s32 %s85, 1
      %s87 = scalar_select %p84, %s85, %s86
      %p90 = pneg %p84
      %p91 = scmp.eq.s32.totalorder %s24, 3
      %p92 = por %p90, %p91
      %p93 = scmp.ne.s32.totalorder %s85, %s88
      %p94 = scmp.eq.s32.totalorder %s24, 0
      %p95 = por %p93, %p94
      %p96 = scmp.ne.s32.totalorder %s85, %s88
      %p97 = scmp.eq.s32.totalorder %s29, 3
      %p98 = por %p96, %p97
      %p99 = scmp.ne.s32.totalorder %s88, %s89
      %p100 = scmp.eq.s32.totalorder %s29, 0
      %p101 = por %p99, %p100
      %p102 = scmp.ne.s32.totalorder %s88, %s89
      %p103 = scmp.eq.s32.totalorder %s30, 3
      %p104 = por %p102, %p103
      %p106 = scmp.ne.s32.totalorder %s89, %s105
      %p107 = scmp.eq.s32.totalorder %s30, 0
      %p108 = por %p106, %p107
      %s109 = ssub.s32 %s31, %s50
      %p110 = scmp.eq.s32.totalorder %s109, 0
      %s112 = sadd.s32 %s111, 1
      %s113 = scalar_select %p110, %s111, %s112
      %p116 = pneg %p110
      %p117 = scmp.eq.s32.totalorder %s24, 3
      %p118 = por %p116, %p117
      %p119 = scmp.ne.s32.totalorder %s111, %s114
      %p120 = scmp.eq.s32.totalorder %s24, 0
      %p121 = por %p119, %p120
      %p122 = scmp.ne.s32.totalorder %s111, %s114
      %p123 = scmp.eq.s32.totalorder %s29, 3
      %p124 = por %p122, %p123
      %p125 = scmp.ne.s32.totalorder %s114, %s115
      %p126 = scmp.eq.s32.totalorder %s29, 0
      %p127 = por %p125, %p126
      %p128 = scmp.ne.s32.totalorder %s114, %s115
      %p129 = scmp.eq.s32.totalorder %s30, 3
      %p130 = por %p128, %p129
      %p132 = scmp.ne.s32.totalorder %s115, %s131
      %p133 = scmp.eq.s32.totalorder %s30, 0
      %p134 = por %p132, %p133
      %p135 = scmp.le.s32.totalorder 1, %s24
      %p136 = scmp.lt.s32.totalorder %s24, 5
      %p137 = pnand %p135, %p136
      %p138 = pneg %p137
      // Predicated region
      $region9: #{tpu_custom_call.1} parent=5 // pred_check
        _
      $region10: #{tpu_custom_call.1} parent=5 // pred_check_branch
        %140 = sbr.rel (%p137) target = $region12
      $region11: #{tpu_custom_call.1} parent=5 // pred_region
        %s141 = ssub.s32 %s24, 1
      $region12: #{tpu_custom_call.1} parent=5 // pred_fallthru
        _
      %p142 = scmp.lt.s32.totalorder %s24, 4
      // Predicated region
      $region13: #{tpu_custom_call.1} parent=5 // pred_check
        %p143 = pneg %p142
      $region14: #{tpu_custom_call.1} parent=5 // pred_check_branch
        %145 = sbr.rel (%p143) target = $region16
      $region15: #{tpu_custom_call.1} parent=5 // pred_region
        // Predicated region
        $region17: #{tpu_custom_call.1} parent=15 // pred_check
          %p146 = pneg %p67
        $region18: #{tpu_custom_call.1} parent=15 // pred_check_branch
          %148 = sbr.rel (%p146) target = $region20
        $region19: #{tpu_custom_call.1} parent=15 // pred_region
          %s149 = sand.u32 %s57, 1
          %s150 = scalar_lea.sflag [#allocation5], %s149
          %s151 = sand.u32 %s57, 1
          %s152 = smul.addr %s151, 16
          %s153 = scalar_lea.vmem [#allocation4], %s152
          %s154 = smul.u32 2, %s31
          %156 = vsyncadd %s150, 0
          %s157 = sadd.s32 %s33, %s154
          %s158 = smul.addr %s32, 2
          %s159 = sadd.s32 %s157, %s158
          %s160 = smul.addr %s159, 8
          %s161 = scalar_lea.hbm %s1, %s160
          %s162 = sshll.u32 %s161, 4
          %s163 = int_to_ptr.hbm [resolvable:$true] %s162
          %s164 = sshll.u32 %s153, 4
          %s165 = int_to_ptr.vmem [resolvable:$true] %s164
          %170 = dma.hbm_to_vmem [thread:$0]  %s163, 256, %s165, %s150, 128, 128, 8
        $region20: #{tpu_custom_call.1} parent=15 // pred_fallthru
          _
        // Predicated region
        $region21: #{tpu_custom_call.1} parent=15 // pred_check
          %p171 = pneg %p95
        $region22: #{tpu_custom_call.1} parent=15 // pred_check_branch
          %173 = sbr.rel (%p171) target = $region24
        $region23: #{tpu_custom_call.1} parent=15 // pred_region
          %s174 = sand.u32 %s85, 1
          %s175 = scalar_lea.sflag [#allocation8], %s174
          %s176 = sand.u32 %s85, 1
          %s177 = smul.addr %s176, 16
          %s178 = scalar_lea.vmem [#allocation7], %s177
          %s179 = smul.u32 2, %s33
          %181 = vsyncadd %s175, 0
          %s182 = smul.addr %s32, 2
          %s183 = sadd.s32 %s179, %s182
          %s184 = smul.addr %s183, 8
          %s185 = scalar_lea.hbm %s2, %s184
          %s186 = sshll.u32 %s185, 4
          %s187 = int_to_ptr.hbm [resolvable:$true] %s186
          %s188 = sshll.u32 %s178, 4
          %s189 = int_to_ptr.vmem [resolvable:$true] %s188
          %194 = dma.hbm_to_vmem [thread:$0]  %s187, 256, %s189, %s175, 128, 128, 8
        $region24: #{tpu_custom_call.1} parent=15 // pred_fallthru
          _
      $region16: #{tpu_custom_call.1} parent=5 // pred_fallthru
        _
      %p195 = scmp.le.s32.totalorder 1, %s24
      %p196 = scmp.lt.s32.totalorder %s24, 5
      %p197 = pnand %p195, %p196
      %p198 = pneg %p197
      // Predicated region
      $region25: #{tpu_custom_call.1} parent=5 // pred_check
        _
      $region26: #{tpu_custom_call.1} parent=5 // pred_check_branch
        %200 = sbr.rel (%p197) target = $region28
      $region27: #{tpu_custom_call.1} parent=5 // pred_region
        %s201 = ssub.s32 %s24, 1
        %s202 = sand.u32 %s60, 1
        %s203 = scalar_lea.sflag [#allocation5], %s202
        %s204 = sand.u32 %s60, 1
        %s205 = smul.addr %s204, 16
        %s206 = scalar_lea.vmem [#allocation4], %s205
        // Predicated region
        $region29: #{tpu_custom_call.1} parent=27 // pred_check
          %p207 = pneg %p73
        $region30: #{tpu_custom_call.1} parent=27 // pred_check_branch
          %209 = sbr.rel (%p207) target = $region32
        $region31: #{tpu_custom_call.1} parent=27 // pred_region
          %211 = dma.done %s203, 256
        $region32: #{tpu_custom_call.1} parent=27 // pred_fallthru
          _
        %s212 = sand.u32 %s88, 1
        %s213 = scalar_lea.sflag [#allocation8], %s212
        %s214 = sand.u32 %s88, 1
        %s215 = smul.addr %s214, 16
        %s216 = scalar_lea.vmem [#allocation7], %s215
        // Predicated region
        $region33: #{tpu_custom_call.1} parent=27 // pred_check
          %p217 = pneg %p101
        $region34: #{tpu_custom_call.1} parent=27 // pred_check_branch
          %219 = sbr.rel (%p217) target = $region36
        $region35: #{tpu_custom_call.1} parent=27 // pred_region
          %221 = dma.done %s213, 256
        $region36: #{tpu_custom_call.1} parent=27 // pred_fallthru
          _
        %s222 = sand.u32 %s60, 1
        %s223 = scalar_lea.sflag [#allocation5], %s222
        %s224 = sand.u32 %s60, 1
        %s225 = smul.addr %s224, 16
        %s226 = scalar_lea.vmem [#allocation4], %s225
        %p227 = pneg %p73
        %p228 = pneg %p70
        %s229 = sand.u32 %s88, 1
        %s230 = scalar_lea.sflag [#allocation8], %s229
        %s231 = sand.u32 %s88, 1
        %s232 = smul.addr %s231, 16
        %s233 = scalar_lea.vmem [#allocation7], %s232
        %p234 = pneg %p101
        %p235 = pneg %p98
        %p236 = pneg %p127
        %p237 = pneg %p124
        %s238 = smul.u32 2, %s34
        %s239 = smul.u32 2, %s36
        %s240 = smul.u32 2, %s34
        %p241 = scmp.eq.s32.totalorder %s35, 0
        %p242 = scmp.eq.s32.totalorder %s36, 0
        %p243 = pnand %p241, %p242
        %p244 = pneg %p243
        // Predicated region
        $region37: #{tpu_custom_call.1} parent=27 // pred_check
          _
        $region38: #{tpu_custom_call.1} parent=27 // pred_check_branch
          %246 = sbr.rel (%p243) target = $region40
        $region39: #{tpu_custom_call.1} parent=27 // pred_region
          %247 = vst [vmem:[#allocation9] sm:$0xff] 0.0
          %248 = vst [vmem:[#allocation9 + $0x8] sm:$0xff] 0.0
        $region40: #{tpu_custom_call.1} parent=27 // pred_fallthru
          _
        %s249 = smul.u32 %s34, 4
        %s250 = sadd.s32 %s249, %s35
        %s251 = sadd.s32 %s250, %s36
        %s252 = sld [smem:[#allocation3 + %s251]]
        %p253 = scmp.ne.s32.totalorder %s252, 0
        // Predicated region
        $region41: #{tpu_custom_call.1} parent=27 // pred_check
          %p254 = pneg %p253
        $region42: #{tpu_custom_call.1} parent=27 // pred_check_branch
          %256 = sbr.rel (%p254) target = $region44
        $region43: #{tpu_custom_call.1} parent=27 // pred_region
          %v257 = vld [vmem:[#allocation9] sm:$0xff]
          %v258 = vld [vmem:[#allocation9 + $0x8] sm:$0xff]
          %v259 = vld [vmem:[%s206] sm:$0xff]
          %v260 = vld [vmem:[%s206 + $0x8] sm:$0xff]
          %v261 = vld [vmem:[%s216] sm:$0xff]
          %v262 = vld [vmem:[%s216 + $0x8] sm:$0xff]
          %vm263 = vcmask 130048
          %v265 = vsel %vm263, %v259, 0
          %v268 = vsel %vm263, %v260, 0
          %270 = vmatpush.msra.mxu0 0.0
          %271 = vmatpush.msra.mxu0 0.0
          %272 = vmatpush.msra.mxu0 0.0
          %273 = vmatpush.msra.mxu0 0.0
          %274 = vmatpush.msra.mxu0 0.0
          %275 = vmatpush.msra.mxu0 0.0
          %276 = vmatpush.msra.mxu0 0.0
          %277 = vmatpush.msra.mxu0 0.0
          %278 = vmatpush.msra.mxu0 0.0
          %279 = vmatpush.msra.mxu0 0.0
          %280 = vmatpush.msra.mxu0 0.0
          %281 = vmatpush.msra.mxu0 0.0
          %282 = vmatpush.msra.mxu0 0.0
          %283 = vmatpush.msra.mxu0 0.0
          %284 = vmatpush.msra.mxu0 %v262
          %285 = vmatpush.msra.mxu0 %v261
          %286 = vmatmul.f32.gmra.mxu0 %v265
          %v287 = vpop.f32.mrf.mxu0
          %v288 = vadd.f32 0.0, %v287
          %289 = vmatmul.f32.gmra.mxu0 %v268
          %v290 = vpop.f32.mrf.mxu0
          %v291 = vadd.f32 0.0, %v290
          %292 = vdwg.mxu0
          %v293 = vadd.f32 %v257, %v288
          %v294 = vadd.f32 %v258, %v291
          %295 = vst [vmem:[#allocation9] sm:$0xff] %v293
          %296 = vst [vmem:[#allocation9 + $0x8] sm:$0xff] %v294
        $region44: #{tpu_custom_call.1} parent=27 // pred_fallthru
          _
        %p297 = scmp.eq.s32.totalorder %s35, 3
        %p298 = pnand %p297, %p242
        %p299 = pneg %p298
        // Predicated region
        $region45: #{tpu_custom_call.1} parent=27 // pred_check
          _
        $region46: #{tpu_custom_call.1} parent=27 // pred_check_branch
          %301 = sbr.rel (%p298) target = $region48
        $region47: #{tpu_custom_call.1} parent=27 // pred_region
          %v302 = vld [vmem:[#allocation9] sm:$0xff]
          %v303 = vld [vmem:[#allocation9 + $0x8] sm:$0xff]
          %v304 = vmax.f32 %v302, 0.0
          %v305 = vmax.f32 %v303, 0.0
          %306 = vst [vmem:[#allocation9] sm:$0xff] %v304
          %307 = vst [vmem:[#allocation9 + $0x8] sm:$0xff] %v305
        $region48: #{tpu_custom_call.1} parent=27 // pred_fallthru
          _
        // Predicated region
        $region49: #{tpu_custom_call.1} parent=27 // pred_check
          %p308 = pneg %p124
        $region50: #{tpu_custom_call.1} parent=27 // pred_check_branch
          %310 = sbr.rel (%p308) target = $region52
        $region51: #{tpu_custom_call.1} parent=27 // pred_region
          %s311 = smul.u32 2, %s34
          %313 = vsyncadd [#allocation6], 0
          %s314 = smul.addr %s311, 8
          %s315 = scalar_lea.hbm %s3, %s314
          %s316 = sshll.u32 [#allocation9], 4
          %s317 = int_to_ptr.vmem [resolvable:$true] %s316
          %s318 = sshll.u32 %s315, 4
          %s319 = int_to_ptr.hbm [resolvable:$true] %s318
          %324 = dma.vmem_to_hbm [thread:$0]  %s317, 256, %s319, [#allocation6], 128, 128, 8
        $region52: #{tpu_custom_call.1} parent=27 // pred_fallthru
          _
        // Predicated region
        $region53: #{tpu_custom_call.1} parent=27 // pred_check
          %p325 = pneg %p124
        $region54: #{tpu_custom_call.1} parent=27 // pred_check_branch
          %327 = sbr.rel (%p325) target = $region56
        $region55: #{tpu_custom_call.1} parent=27 // pred_region
          %329 = dma.done [#allocation6], 256
        $region56: #{tpu_custom_call.1} parent=27 // pred_fallthru
          _
      $region28: #{tpu_custom_call.1} parent=5 // pred_fallthru
        _
      %p330 = scmp.le.s32.totalorder 2, %s24
      // Predicated region
      $region57: #{tpu_custom_call.1} parent=5 // pred_check
        %p331 = pneg %p330
      $region58: #{tpu_custom_call.1} parent=5 // pred_check_branch
        %333 = sbr.rel (%p331) target = $region60
      $region59: #{tpu_custom_call.1} parent=5 // pred_region
        %s334 = ssub.s32 %s24, 2
      $region60: #{tpu_custom_call.1} parent=5 // pred_fallthru
        _
    $region6: #{tpu_custom_call.1} parent=1 // loop_footer
      %s28 = sadd.s32 1, %s24
    $region7: #{tpu_custom_call.1} parent=1 // loop_footer_branch
      %23 = sbr.rel target = $region3
    $region8: #{tpu_custom_call.1} parent=1 // loop_exit
      _
    %335 = vsyncpa [#allocation5], 1
    %s336 = scalar_lea.sflag [#allocation5], 1
    %337 = vsyncpa %s336, 1
    %338 = vsyncpa [#allocation8], 1
    %s339 = scalar_lea.sflag [#allocation8], 1
    %340 = vsyncpa %s339, 1
    %341 = vsyncpa [#allocation6], 1
    %s342 = scalar_lea.sflag [#allocation6], 1
    %343 = vsyncpa %s342, 1

</llo_original>
